<compile_context>
chip_gen: v7x
topology: tpu7x:2x2x1
jax: 0.10.0
libtpu: 0.0.40
codegen_flags: <defaults>
</compile_context>

<pallas_src>
import jax
import jax.numpy as jnp
from jax.experimental import pallas as pl
from jax.experimental.pallas import tpu as pltpu


def basic_stem_forward(x_nchw, weight, gamma, beta, run_mean, run_var, eps=1e-5):
    N, Cin, H, W = x_nchw.shape
    Cout, _, KH, KW = weight.shape
    stride, pad = 2, 3
    Ho = (H + 2 * pad - KH) // stride + 1
    Wo = (W + 2 * pad - KW) // stride + 1
    # max-pool 3x3 / stride 2 / pad 1
    Hp = (Ho + 2 * 1 - 3) // 2 + 1
    Wp = (Wo + 2 * 1 - 3) // 2 + 1
    K = KH * KW * Cin
    HpWp = Hp * Wp

    # ---- XLA glue: NCHW -> NHWC (bf16), zero-pad, build "parity plane" im2col patches ------
    # Plane (dy,dx) holds the im2col rows of conv positions (2*hp+dy, 2*wp+dx), i.e. exactly
    # the conv outputs the 3x3/s2 pool needs, grouped so pooling reduces to shifts + max.
    x = jnp.transpose(x_nchw, (0, 2, 3, 1)).astype(jnp.bfloat16)
    PH = 4 * Hp + 8                       # enough zero padding for every (dy,ky) slice
    PW = 4 * Wp + 8
    xp = jnp.pad(x, ((0, 0), (pad, PH - H - pad), (pad, PW - W - pad), (0, 0)))

    planes = []
    for dy in (0, 1):
        for dx in (0, 1):
            taps = []
            for ky in range(KH):
                for kx in range(KW):
                    r0 = 2 * dy + ky
                    c0 = 2 * dx + kx
                    taps.append(xp[:, r0:r0 + 4 * Hp:4, c0:c0 + 4 * Wp:4, :])
            p = jnp.stack(taps, axis=3).reshape(N, HpWp, K)      # (N, Hp*Wp, 49*Cin) bf16
            planes.append(p)
    planes = jnp.stack(planes, axis=1)                           # (N, 4, Hp*Wp, K): ee,eo,oe,oo

    # fold eval-mode BN scale into the weight matrix; only the bias add stays in-kernel.
    inv_std = 1.0 / jnp.sqrt(run_var.astype(jnp.float32) + eps)
    scale = gamma.astype(jnp.float32) * inv_std
    bias = (beta.astype(jnp.float32) - run_mean.astype(jnp.float32) * scale).reshape(1, Cout)
    w_mat = jnp.transpose(weight, (2, 3, 1, 0)).reshape(K, Cout)
    w_mat = (w_mat.astype(jnp.float32) * scale[None, :]).astype(jnp.bfloat16)

    def fused_stem_kernel(p_ref, w_ref, b_ref, o_ref, sh_ref):
        # p_ref: (1, 4, Hp*Wp, K) bf16   w_ref: (K, Cout) bf16   b_ref: (1, Cout) f32
        # o_ref: (1, Hp*Wp, Cout) f32    sh_ref: (Hp*Wp + Wp + 1, Cout) f32 scratch
        def conv(i):
            acc = jnp.dot(p_ref[0, i], w_ref[...], preferred_element_type=jnp.float32)
            return jnp.maximum(acc + b_ref[...], 0.0)            # folded BN bias + ReLU

        ee, eo, oe, oo = conv(0), conv(1), conv(2), conv(3)

        idx = jax.lax.broadcasted_iota(jnp.int32, (HpWp, 1), 0)
        if Ho % 2 == 1:       # odd Ho: dy=1 planes fall off the conv grid on the last row
            hbad = (idx // Wp) == (Hp - 1)
            oe = jnp.where(hbad, 0.0, oe)
            oo = jnp.where(hbad, 0.0, oo)
        if Wo % 2 == 1:       # odd Wo: dx=1 planes fall off on the last column
            wbad = (idx % Wp) == (Wp - 1)
            eo = jnp.where(wbad, 0.0, eo)
            oo = jnp.where(wbad, 0.0, oo)

        wp0 = (idx % Wp) == 0   # first pooled column -> (.., 2wp-1) taps are pool padding

        # Zero apron: a plane stored at row offset Wp+1 and re-read at offsets Wp / 1 / 0 is
        # the plane shifted by 1 / Wp / Wp+1 pooled positions with zero fill (exact pool pad
        # because all values are post-ReLU >= 0).
        sh_ref[pl.ds(0, Wp + 1), :] = jnp.zeros((Wp + 1, Cout), jnp.float32)

        m = jnp.maximum(jnp.maximum(ee, eo), jnp.maximum(oe, oo))

        sh_ref[pl.ds(Wp + 1, HpWp), :] = eo
        m = jnp.maximum(m, jnp.where(wp0, 0.0, sh_ref[pl.ds(Wp, HpWp), :]))    # (2hp,   2wp-1)

        sh_ref[pl.ds(Wp + 1, HpWp), :] = oe
        m = jnp.maximum(m, sh_ref[pl.ds(1, HpWp), :])                          # (2hp-1, 2wp)

        sh_ref[pl.ds(Wp + 1, HpWp), :] = oo
        m = jnp.maximum(m, sh_ref[pl.ds(1, HpWp), :])                          # (2hp-1, 2wp+1)
        m = jnp.maximum(m, jnp.where(wp0, 0.0, sh_ref[pl.ds(Wp, HpWp), :]))    # (2hp+1, 2wp-1)
        m = jnp.maximum(m, jnp.where(wp0, 0.0, sh_ref[pl.ds(0, HpWp), :]))     # (2hp-1, 2wp-1)

        o_ref[0] = m.astype(o_ref.dtype)

    pooled = pl.pallas_call(
        fused_stem_kernel,
        out_shape=jax.ShapeDtypeStruct((N, HpWp, Cout), jnp.float32),
        grid=(N,),
        in_specs=[
            pl.BlockSpec((1, 4, HpWp, K), lambda n: (n, 0, 0, 0)),
            pl.BlockSpec((K, Cout), lambda n: (0, 0)),
            pl.BlockSpec((1, Cout), lambda n: (0, 0)),
        ],
        out_specs=pl.BlockSpec((1, HpWp, Cout), lambda n: (n, 0, 0)),
        scratch_shapes=[pltpu.VMEM((HpWp + Wp + 1, Cout), jnp.float32)],
        compiler_params=pltpu.CompilerParams(
            dimension_semantics=("parallel",),
            vmem_limit_bytes=48 * 1024 * 1024),
    )(planes, w_mat, bias)

    out = pooled.reshape(N, Hp, Wp, Cout)
    return jnp.transpose(out, (0, 3, 1, 2))      # back to NCHW


if __name__ == "__main__":
    key = jax.random.PRNGKey(0)
    k1, k2, k3, k4, k5 = jax.random.split(key, 5)

    N, Cin, Cout, H, W = 2, 3, 64, 16, 16
    x = jax.random.normal(k1, (N, Cin, H, W), jnp.float32)

    # c2_msra_fill: kaiming normal, fan_out mode, relu gain
    fan_out = Cout * 7 * 7
    weight = jax.random.normal(k2, (Cout, Cin, 7, 7), jnp.float32) * jnp.sqrt(2.0 / fan_out)

    gamma = 1.0 + 0.1 * jax.random.normal(k3, (Cout,), jnp.float32)
    beta = 0.1 * jax.random.normal(k4, (Cout,), jnp.float32)
    run_mean = 0.1 * jax.random.normal(k5, (Cout,), jnp.float32)
    run_var = jnp.ones((Cout,), jnp.float32)

    out = jax.jit(basic_stem_forward)(x, weight, gamma, beta, run_mean, run_var)
    out = jax.block_until_ready(out)
    assert out.shape == (N, Cout, H // 4, W // 4), out.shape

    # plain-XLA f32 reference (eval-mode BN); tolerance loosened for bf16 conv operands.
    ref = jax.lax.conv_general_dilated(
        x, weight, window_strides=(2, 2), padding=((3, 3), (3, 3)),
        dimension_numbers=("NCHW", "OIHW", "NCHW"))
    ref = (ref - run_mean[None, :, None, None]) / jnp.sqrt(run_var + 1e-5)[None, :, None, None]
    ref = ref * gamma[None, :, None, None] + beta[None, :, None, None]
    ref = jnp.maximum(ref, 0.0)
    ref = jax.lax.reduce_window(ref, -jnp.inf, jax.lax.max,
                                (1, 1, 3, 3), (1, 1, 2, 2),
                                ((0, 0), (0, 0), (1, 1), (1, 1)))
    assert jnp.allclose(out, ref, atol=2e-2, rtol=2e-2), float(jnp.max(jnp.abs(out - ref)))

    print("KERNEL_OK")
</pallas_src>

<mosaic_0001>
module attributes {stable_mosaic.version = 11 : i64} {
  func.func @fused_stem_kernel(%arg0: i32, %arg1: memref<1x4x16x147xbf16, #tpu.memory_space<vmem>>, %arg2: memref<147x64xbf16, #tpu.memory_space<vmem>>, %arg3: memref<1x64xf32, #tpu.memory_space<vmem>>, %arg4: memref<1x16x64xf32, #tpu.memory_space<vmem>>, %arg5: memref<21x64xf32, #tpu.memory_space<vmem>>) attributes {dimension_semantics = [#tpu.dimension_semantics<parallel>], iteration_bounds = array<i64: 2>, scalar_prefetch = 0 : i64, scratch_operands = 1 : i64, tpu.core_type = #tpu.core_type<tc>, window_params = [{transform_indices = @transform_0, window_bounds = array<i64: 1, 4, 16, 147>}, {pipeline_mode = #tpu.pipeline_mode<synchronous>, transform_indices = @transform_1, window_bounds = array<i64: 147, 64>}, {pipeline_mode = #tpu.pipeline_mode<synchronous>, transform_indices = @transform_2, window_bounds = array<i64: 1, 64>}, {transform_indices = @transform_3, window_bounds = array<i64: 1, 16, 64>}]} {
    %c0 = arith.constant 0 : index
    %c0_0 = arith.constant 0 : index
    %c0_1 = arith.constant 0 : index
    %c0_2 = arith.constant 0 : index
    %0 = vector.load %arg1[%c0, %c0_0, %c0_1, %c0_2] : memref<1x4x16x147xbf16, #tpu.memory_space<vmem>>, vector<1x1x16x147xbf16>
    %1 = vector.shape_cast %0 : vector<1x1x16x147xbf16> to vector<16x147xbf16>
    %c0_3 = arith.constant 0 : index
    %c0_4 = arith.constant 0 : index
    %2 = vector.load %arg2[%c0_3, %c0_4] : memref<147x64xbf16, #tpu.memory_space<vmem>>, vector<147x64xbf16>
    %cst = arith.constant dense<0.000000e+00> : vector<16x64xf32>
    %3 = tpu.matmul %1, %2, %cst {dimension_numbers = #tpu.dot_dimension_numbers<[1], [0], [0], [1], [0, 0, 1, 1], [], []>} : vector<16x147xbf16>, vector<147x64xbf16>, vector<16x64xf32> -> vector<16x64xf32>
    %c0_5 = arith.constant 0 : index
    %c0_6 = arith.constant 0 : index
    %4 = vector.load %arg3[%c0_5, %c0_6] : memref<1x64xf32, #tpu.memory_space<vmem>>, vector<1x64xf32>
    %5 = vector.broadcast %4 : vector<1x64xf32> to vector<16x64xf32>
    %6 = arith.addf %3, %5 : vector<16x64xf32>
    %cst_7 = arith.constant 0.000000e+00 : f32
    %7 = vector.broadcast %cst_7 : f32 to vector<16x64xf32>
    %8 = arith.maximumf %6, %7 : vector<16x64xf32>
    %c0_8 = arith.constant 0 : index
    %c1 = arith.constant 1 : index
    %c0_9 = arith.constant 0 : index
    %c0_10 = arith.constant 0 : index
    %9 = vector.load %arg1[%c0_8, %c1, %c0_9, %c0_10] : memref<1x4x16x147xbf16, #tpu.memory_space<vmem>>, vector<1x1x16x147xbf16>
    %10 = vector.shape_cast %9 : vector<1x1x16x147xbf16> to vector<16x147xbf16>
    %c0_11 = arith.constant 0 : index
    %c0_12 = arith.constant 0 : index
    %11 = vector.load %arg2[%c0_11, %c0_12] : memref<147x64xbf16, #tpu.memory_space<vmem>>, vector<147x64xbf16>
    %cst_13 = arith.constant dense<0.000000e+00> : vector<16x64xf32>
    %12 = tpu.matmul %10, %11, %cst_13 {dimension_numbers = #tpu.dot_dimension_numbers<[1], [0], [0], [1], [0, 0, 1, 1], [], []>} : vector<16x147xbf16>, vector<147x64xbf16>, vector<16x64xf32> -> vector<16x64xf32>
    %c0_14 = arith.constant 0 : index
    %c0_15 = arith.constant 0 : index
    %13 = vector.load %arg3[%c0_14, %c0_15] : memref<1x64xf32, #tpu.memory_space<vmem>>, vector<1x64xf32>
    %14 = vector.broadcast %13 : vector<1x64xf32> to vector<16x64xf32>
    %15 = arith.addf %12, %14 : vector<16x64xf32>
    %cst_16 = arith.constant 0.000000e+00 : f32
    %16 = vector.broadcast %cst_16 : f32 to vector<16x64xf32>
    %17 = arith.maximumf %15, %16 : vector<16x64xf32>
    %c0_17 = arith.constant 0 : index
    %c2 = arith.constant 2 : index
    %c0_18 = arith.constant 0 : index
    %c0_19 = arith.constant 0 : index
    %18 = vector.load %arg1[%c0_17, %c2, %c0_18, %c0_19] : memref<1x4x16x147xbf16, #tpu.memory_space<vmem>>, vector<1x1x16x147xbf16>
    %19 = vector.shape_cast %18 : vector<1x1x16x147xbf16> to vector<16x147xbf16>
    %c0_20 = arith.constant 0 : index
    %c0_21 = arith.constant 0 : index
    %20 = vector.load %arg2[%c0_20, %c0_21] : memref<147x64xbf16, #tpu.memory_space<vmem>>, vector<147x64xbf16>
    %cst_22 = arith.constant dense<0.000000e+00> : vector<16x64xf32>
    %21 = tpu.matmul %19, %20, %cst_22 {dimension_numbers = #tpu.dot_dimension_numbers<[1], [0], [0], [1], [0, 0, 1, 1], [], []>} : vector<16x147xbf16>, vector<147x64xbf16>, vector<16x64xf32> -> vector<16x64xf32>
    %c0_23 = arith.constant 0 : index
    %c0_24 = arith.constant 0 : index
    %22 = vector.load %arg3[%c0_23, %c0_24] : memref<1x64xf32, #tpu.memory_space<vmem>>, vector<1x64xf32>
    %23 = vector.broadcast %22 : vector<1x64xf32> to vector<16x64xf32>
    %24 = arith.addf %21, %23 : vector<16x64xf32>
    %cst_25 = arith.constant 0.000000e+00 : f32
    %25 = vector.broadcast %cst_25 : f32 to vector<16x64xf32>
    %26 = arith.maximumf %24, %25 : vector<16x64xf32>
    %c0_26 = arith.constant 0 : index
    %c3 = arith.constant 3 : index
    %c0_27 = arith.constant 0 : index
    %c0_28 = arith.constant 0 : index
    %27 = vector.load %arg1[%c0_26, %c3, %c0_27, %c0_28] : memref<1x4x16x147xbf16, #tpu.memory_space<vmem>>, vector<1x1x16x147xbf16>
    %28 = vector.shape_cast %27 : vector<1x1x16x147xbf16> to vector<16x147xbf16>
    %c0_29 = arith.constant 0 : index
    %c0_30 = arith.constant 0 : index
    %29 = vector.load %arg2[%c0_29, %c0_30] : memref<147x64xbf16, #tpu.memory_space<vmem>>, vector<147x64xbf16>
    %cst_31 = arith.constant dense<0.000000e+00> : vector<16x64xf32>
    %30 = tpu.matmul %28, %29, %cst_31 {dimension_numbers = #tpu.dot_dimension_numbers<[1], [0], [0], [1], [0, 0, 1, 1], [], []>} : vector<16x147xbf16>, vector<147x64xbf16>, vector<16x64xf32> -> vector<16x64xf32>
    %c0_32 = arith.constant 0 : index
    %c0_33 = arith.constant 0 : index
    %31 = vector.load %arg3[%c0_32, %c0_33] : memref<1x64xf32, #tpu.memory_space<vmem>>, vector<1x64xf32>
    %32 = vector.broadcast %31 : vector<1x64xf32> to vector<16x64xf32>
    %33 = arith.addf %30, %32 : vector<16x64xf32>
    %cst_34 = arith.constant 0.000000e+00 : f32
    %34 = vector.broadcast %cst_34 : f32 to vector<16x64xf32>
    %35 = arith.maximumf %33, %34 : vector<16x64xf32>
    %36 = tpu.iota {dimensions = array<i32: 0>} : vector<16x1xi32>
    %c4_i32 = arith.constant 4 : i32
    %c0_i32 = arith.constant 0 : i32
    %37 = arith.cmpi eq, %c4_i32, %c0_i32 : i32
    %c1_i32 = arith.constant 1 : i32
    %38 = arith.select %37, %c1_i32, %c4_i32 : i32
    %39 = vector.broadcast %38 : i32 to vector<16x1xi32>
    %40 = arith.remsi %36, %39 : vector<16x1xi32>
    %c0_i32_35 = arith.constant 0 : i32
    %41 = vector.broadcast %c0_i32_35 : i32 to vector<16x1xi32>
    %42 = arith.cmpi ne, %40, %41 : vector<16x1xi32>
    %c0_i32_36 = arith.constant 0 : i32
    %43 = vector.broadcast %c0_i32_36 : i32 to vector<16x1xi32>
    %44 = arith.cmpi slt, %40, %43 : vector<16x1xi32>
    %c0_i32_37 = arith.constant 0 : i32
    %45 = arith.cmpi slt, %38, %c0_i32_37 : i32
    %46 = vector.broadcast %45 : i1 to vector<16x1xi1>
    %47 = vector.broadcast %46 : vector<16x1xi1> to vector<16x1xi1>
    %48 = arith.xori %44, %47 : vector<16x1xi1>
    %49 = arith.andi %48, %42 : vector<16x1xi1>
    %50 = vector.broadcast %38 : i32 to vector<16x1xi32>
    %51 = arith.addi %40, %50 : vector<16x1xi32>
    %52 = arith.select %49, %51, %40 : vector<16x1xi1>, vector<16x1xi32>
    %c0_i32_38 = arith.constant 0 : i32
    %53 = vector.broadcast %c0_i32_38 : i32 to vector<16x1xi32>
    %54 = arith.cmpi eq, %52, %53 : vector<16x1xi32>
    %cst_39 = arith.constant 0.000000e+00 : f32
    %55 = vector.broadcast %cst_39 : f32 to vector<5x64xf32>
    %c0_40 = arith.constant 0 : index
    %c0_41 = arith.constant 0 : index
    %56 = vector.load %arg5[%c0_40, %c0_41] : memref<21x64xf32, #tpu.memory_space<vmem>>, vector<5x64xf32>
    tpu.vector_store %arg5[%c0_40, %c0_41], %55 {strides = array<i32>} : memref<21x64xf32, #tpu.memory_space<vmem>>, vector<5x64xf32>,
    %57 = arith.maximumf %8, %17 : vector<16x64xf32>
    %58 = arith.maximumf %26, %35 : vector<16x64xf32>
    %59 = arith.maximumf %57, %58 : vector<16x64xf32>
    %c5 = arith.constant 5 : index
    %c0_42 = arith.constant 0 : index
    %60 = vector.load %arg5[%c5, %c0_42] : memref<21x64xf32, #tpu.memory_space<vmem>>, vector<16x64xf32>
    tpu.vector_store %arg5[%c5, %c0_42], %17 {strides = array<i32>} : memref<21x64xf32, #tpu.memory_space<vmem>>, vector<16x64xf32>,
    %c4 = arith.constant 4 : index
    %c0_43 = arith.constant 0 : index
    %61 = vector.load %arg5[%c4, %c0_43] : memref<21x64xf32, #tpu.memory_space<vmem>>, vector<16x64xf32>
    %cst_44 = arith.constant 0.000000e+00 : f32
    %62 = vector.shape_cast %54 : vector<16x1xi1> to vector<16x1xi1>
    %63 = vector.broadcast %62 : vector<16x1xi1> to vector<16x64xi1>
    %64 = vector.broadcast %cst_44 : f32 to vector<16x64xf32>
    %65 = arith.select %63, %64, %61 : vector<16x64xi1>, vector<16x64xf32>
    %66 = arith.maximumf %59, %65 : vector<16x64xf32>
    %c5_45 = arith.constant 5 : index
    %c0_46 = arith.constant 0 : index
    %67 = vector.load %arg5[%c5_45, %c0_46] : memref<21x64xf32, #tpu.memory_space<vmem>>, vector<16x64xf32>
    tpu.vector_store %arg5[%c5_45, %c0_46], %26 {strides = array<i32>} : memref<21x64xf32, #tpu.memory_space<vmem>>, vector<16x64xf32>,
    %c1_47 = arith.constant 1 : index
    %c0_48 = arith.constant 0 : index
    %68 = vector.load %arg5[%c1_47, %c0_48] : memref<21x64xf32, #tpu.memory_space<vmem>>, vector<16x64xf32>
    %69 = arith.maximumf %66, %68 : vector<16x64xf32>
    %c5_49 = arith.constant 5 : index
    %c0_50 = arith.constant 0 : index
    %70 = vector.load %arg5[%c5_49, %c0_50] : memref<21x64xf32, #tpu.memory_space<vmem>>, vector<16x64xf32>
    tpu.vector_store %arg5[%c5_49, %c0_50], %35 {strides = array<i32>} : memref<21x64xf32, #tpu.memory_space<vmem>>, vector<16x64xf32>,
    %c1_51 = arith.constant 1 : index
    %c0_52 = arith.constant 0 : index
    %71 = vector.load %arg5[%c1_51, %c0_52] : memref<21x64xf32, #tpu.memory_space<vmem>>, vector<16x64xf32>
    %72 = arith.maximumf %69, %71 : vector<16x64xf32>
    %c4_53 = arith.constant 4 : index
    %c0_54 = arith.constant 0 : index
    %73 = vector.load %arg5[%c4_53, %c0_54] : memref<21x64xf32, #tpu.memory_space<vmem>>, vector<16x64xf32>
    %cst_55 = arith.constant 0.000000e+00 : f32
    %74 = vector.shape_cast %54 : vector<16x1xi1> to vector<16x1xi1>
    %75 = vector.broadcast %74 : vector<16x1xi1> to vector<16x64xi1>
    %76 = vector.broadcast %cst_55 : f32 to vector<16x64xf32>
    %77 = arith.select %75, %76, %73 : vector<16x64xi1>, vector<16x64xf32>
    %78 = arith.maximumf %72, %77 : vector<16x64xf32>
    %c0_56 = arith.constant 0 : index
    %c0_57 = arith.constant 0 : index
    %79 = vector.load %arg5[%c0_56, %c0_57] : memref<21x64xf32, #tpu.memory_space<vmem>>, vector<16x64xf32>
    %cst_58 = arith.constant 0.000000e+00 : f32
    %80 = vector.shape_cast %54 : vector<16x1xi1> to vector<16x1xi1>
    %81 = vector.broadcast %80 : vector<16x1xi1> to vector<16x64xi1>
    %82 = vector.broadcast %cst_58 : f32 to vector<16x64xf32>
    %83 = arith.select %81, %82, %79 : vector<16x64xi1>, vector<16x64xf32>
    %84 = arith.maximumf %78, %83 : vector<16x64xf32>
    %c0_59 = arith.constant 0 : index
    %c0_60 = arith.constant 0 : index
    %c0_61 = arith.constant 0 : index
    %85 = vector.load %arg4[%c0_59, %c0_60, %c0_61] : memref<1x16x64xf32, #tpu.memory_space<vmem>>, vector<1x16x64xf32>
    %86 = vector.shape_cast %85 : vector<1x16x64xf32> to vector<16x64xf32>
    %87 = vector.shape_cast %84 : vector<16x64xf32> to vector<1x16x64xf32>
    tpu.vector_store %arg4[%c0_59, %c0_60, %c0_61], %87 {strides = array<i32>} : memref<1x16x64xf32, #tpu.memory_space<vmem>>, vector<1x16x64xf32>,
    return
  }
  func.func @transform_0(%arg0: i32) -> (i32, i32, i32, i32) {
    %c0_i32 = arith.constant 0 : i32
    %c0_i32_0 = arith.constant 0 : i32
    %c0_i32_1 = arith.constant 0 : i32
    %c0_i32_2 = arith.constant 0 : i32
    return %arg0, %c0_i32, %c0_i32_0, %c0_i32_1 : i32, i32, i32, i32
  }
  func.func @transform_1(%arg0: i32) -> (i32, i32) {
    %c0_i32 = arith.constant 0 : i32
    %c0_i32_0 = arith.constant 0 : i32
    %c0_i32_1 = arith.constant 0 : i32
    return %c0_i32, %c0_i32_0 : i32, i32
  }
  func.func @transform_2(%arg0: i32) -> (i32, i32) {
    %c0_i32 = arith.constant 0 : i32
    %c0_i32_0 = arith.constant 0 : i32
    %c0_i32_1 = arith.constant 0 : i32
    return %c0_i32, %c0_i32_0 : i32, i32
  }
  func.func @transform_3(%arg0: i32) -> (i32, i32, i32) {
    %c0_i32 = arith.constant 0 : i32
    %c0_i32_0 = arith.constant 0 : i32
    %c0_i32_1 = arith.constant 0 : i32
    return %arg0, %c0_i32, %c0_i32_0 : i32, i32, i32
  }
}

</mosaic_0001>

<llo_original>
// kernel: basic_stem_forward.1
$region0: #{basic_stem_forward.1}
  #allocation0 [shape = 'u32[]', space=smem, size = 0x4, offset = 0x4, fixed_abs, tag = 'smem constant byte address 0x4 - core index']
  #allocation1 [shape = 'u32[144,128]{1,0:T(1,128)}', space=vmem, size = 0x12000, scoped, tag = 'internal scratch']
  #allocation2 [shape = 'f32[21,64]{1,0:T(8,128)}', space=vmem, size = 0x3000, scoped, tag = 'scratch operand']
  %s0 = inlined_call_operand.vmem [shape: bf16[2,4,16,147], index: 0, kind: input, shape index: {}]
  %s1 = inlined_call_operand.vmem [shape: bf16[147,64], index: 1, kind: input, shape index: {}]
  %s2 = inlined_call_operand.vmem [shape: f32[1,64], index: 2, kind: input, shape index: {}]
  %s3 = inlined_call_operand.hbm [shape: f32[2,16,64], index: 3, kind: output, shape index: {}]
  %s4 = sld [smem:[#allocation0]]
  $region45: #{basic_stem_forward.1} parent=0
    _
  %s6 = ssub.s32 1, %s4
  %s7 = scalar_select 0, %s6, %s4
  $region1: #{basic_stem_forward.1} parent=0
    #allocation3 [shape = 'u8[16384]{0}', space=vmem, size = 0x4000, scoped, tag = 'output window, operand 0']
    #allocation4 [shape = 's32[2]{0}', space=sflag, size = 0x8, scoped, tag = 'scoped memory for basic_stem_forward.1']
    %8 = vsyncpa [#allocation4], 0
    %s9 = scalar_lea.sflag [#allocation4], 1
    %10 = vsyncpa %s9, 0
    loop: start=0, step=1, limit=4
    $region2: #{basic_stem_forward.1} parent=1 // loop_pre_header
      _
    $region3: #{basic_stem_forward.1} parent=1 // loop_header
      %s12 = sphi 0, %s16
      %p13 = scmp.ge.s32.totalorder %s12, 4
      %s22 = sphi 0, %s24
      %s25 = sphi 0, %s22
      %s26 = sphi 0, %s25
      %s42 = sphi 0, %s26
      %s46 = sphi 0, %s46
      %s48 = sphi 0, %s46
      %s49 = sphi 0, %s48
      %s63 = sphi 0, %s49
      %s67 = sphi 0, %s67
      %s69 = sphi 0, %s67
      %s70 = sphi 0, %s69
      %s84 = sphi 0, %s70
      %s90 = sphi 0, %s92
      %s93 = sphi 0, %s90
      %s94 = sphi 0, %s93
      %s110 = sphi 0, %s94
    $region4: #{basic_stem_forward.1} parent=1 // loop_header_branch
      %15 = sbr.rel (%p13) target = $region8
    $region5: #{basic_stem_forward.1} parent=1 // loop_body
      %s17 = ssub.s32 %s12, 1
      %s18 = ssub.s32 %s12, 2
      %s19 = sadd.s32 %s12, 1
      %s20 = ssub.s32 %s12, %s19
      %p21 = scmp.eq.s32.totalorder %s20, 0
      %s23 = sadd.s32 %s22, 1
      %s24 = scalar_select %p21, %s22, %s23
      %p27 = pneg %p21
      %p28 = scmp.eq.s32.totalorder %s12, 1
      %p29 = por %p27, %p28
      %p30 = scmp.ne.s32.totalorder %s22, %s25
      %p31 = scmp.eq.s32.totalorder %s12, 0
      %p32 = por %p30, %p31
      %p33 = scmp.ne.s32.totalorder %s22, %s25
      %p34 = scmp.eq.s32.totalorder %s17, 1
      %p35 = por %p33, %p34
      %p36 = scmp.ne.s32.totalorder %s25, %s26
      %p37 = scmp.eq.s32.totalorder %s17, 0
      %p38 = por %p36, %p37
      %p39 = scmp.ne.s32.totalorder %s25, %s26
      %p40 = scmp.eq.s32.totalorder %s18, 1
      %p41 = por %p39, %p40
      %p43 = scmp.ne.s32.totalorder %s26, %s42
      %p44 = scmp.eq.s32.totalorder %s18, 0
      %p45 = por %p43, %p44
      %s47 = sadd.s32 %s46, 1
      %p50 = scmp.eq.s32.totalorder %s12, 1
      %p51 = scmp.ne.s32.totalorder %s46, %s48
      %p52 = scmp.eq.s32.totalorder %s12, 0
      %p53 = por %p51, %p52
      %p54 = scmp.ne.s32.totalorder %s46, %s48
      %p55 = scmp.eq.s32.totalorder %s17, 1
      %p56 = por %p54, %p55
      %p57 = scmp.ne.s32.totalorder %s48, %s49
      %p58 = scmp.eq.s32.totalorder %s17, 0
      %p59 = por %p57, %p58
      %p60 = scmp.ne.s32.totalorder %s48, %s49
      %p61 = scmp.eq.s32.totalorder %s18, 1
      %p62 = por %p60, %p61
      %p64 = scmp.ne.s32.totalorder %s49, %s63
      %p65 = scmp.eq.s32.totalorder %s18, 0
      %p66 = por %p64, %p65
      %s68 = sadd.s32 %s67, 1
      %p71 = scmp.eq.s32.totalorder %s12, 1
      %p72 = scmp.ne.s32.totalorder %s67, %s69
      %p73 = scmp.eq.s32.totalorder %s12, 0
      %p74 = por %p72, %p73
      %p75 = scmp.ne.s32.totalorder %s67, %s69
      %p76 = scmp.eq.s32.totalorder %s17, 1
      %p77 = por %p75, %p76
      %p78 = scmp.ne.s32.totalorder %s69, %s70
      %p79 = scmp.eq.s32.totalorder %s17, 0
      %p80 = por %p78, %p79
      %p81 = scmp.ne.s32.totalorder %s69, %s70
      %p82 = scmp.eq.s32.totalorder %s18, 1
      %p83 = por %p81, %p82
      %p85 = scmp.ne.s32.totalorder %s70, %s84
      %p86 = scmp.eq.s32.totalorder %s18, 0
      %p87 = por %p85, %p86
      %s88 = ssub.s32 %s12, %s19
      %p89 = scmp.eq.s32.totalorder %s88, 0
      %s91 = sadd.s32 %s90, 1
      %s92 = scalar_select %p89, %s90, %s91
      %p95 = pneg %p89
      %p96 = scmp.eq.s32.totalorder %s12, 1
      %p97 = por %p95, %p96
      %p98 = scmp.ne.s32.totalorder %s90, %s93
      %p99 = scmp.eq.s32.totalorder %s12, 0
      %p100 = por %p98, %p99
      %p101 = scmp.ne.s32.totalorder %s90, %s93
      %p102 = scmp.eq.s32.totalorder %s17, 1
      %p103 = por %p101, %p102
      %p104 = scmp.ne.s32.totalorder %s93, %s94
      %p105 = scmp.eq.s32.totalorder %s17, 0
      %p106 = por %p104, %p105
      %p107 = scmp.ne.s32.totalorder %s93, %s94
      %p108 = scmp.eq.s32.totalorder %s18, 1
      %p109 = por %p107, %p108
      %p111 = scmp.ne.s32.totalorder %s94, %s110
      %p112 = scmp.eq.s32.totalorder %s18, 0
      %p113 = por %p111, %p112
      %p114 = scmp.le.s32.totalorder 1, %s12
      %p115 = scmp.lt.s32.totalorder %s12, 3
      %p116 = pnand %p114, %p115
      %p117 = pneg %p116
      // Predicated region
      $region9: #{basic_stem_forward.1} parent=5 // pred_check
        _
      $region10: #{basic_stem_forward.1} parent=5 // pred_check_branch
        %119 = sbr.rel (%p116) target = $region12
      $region11: #{basic_stem_forward.1} parent=5 // pred_region
        %s120 = ssub.s32 %s12, 1
        // Predicated region
        $region13: #{basic_stem_forward.1} parent=11 // pred_check
          %p121 = pneg %p59
        $region14: #{basic_stem_forward.1} parent=11 // pred_check_branch
          %123 = sbr.rel (%p121) target = $region16
        $region15: #{basic_stem_forward.1} parent=11 // pred_region
          _
        $region16: #{basic_stem_forward.1} parent=11 // pred_fallthru
          _
        // Predicated region
        $region17: #{basic_stem_forward.1} parent=11 // pred_check
          %p124 = pneg %p80
        $region18: #{basic_stem_forward.1} parent=11 // pred_check_branch
          %126 = sbr.rel (%p124) target = $region20
        $region19: #{basic_stem_forward.1} parent=11 // pred_region
          _
        $region20: #{basic_stem_forward.1} parent=11 // pred_fallthru
          _
      $region12: #{basic_stem_forward.1} parent=5 // pred_fallthru
        _
      %p127 = scmp.lt.s32.totalorder %s12, 2
      // Predicated region
      $region21: #{basic_stem_forward.1} parent=5 // pred_check
        %p128 = pneg %p127
      $region22: #{basic_stem_forward.1} parent=5 // pred_check_branch
        %130 = sbr.rel (%p128) target = $region24
      $region23: #{basic_stem_forward.1} parent=5 // pred_region
        // Predicated region
        $region25: #{basic_stem_forward.1} parent=23 // pred_check
          %p131 = pneg %p32
        $region26: #{basic_stem_forward.1} parent=23 // pred_check_branch
          %133 = sbr.rel (%p131) target = $region28
        $region27: #{basic_stem_forward.1} parent=23 // pred_region
          %p134 = scmp.lt.s32.totalorder %s12, 1
          %s135 = scalar_select %p134, %s12, 1
          %s136 = smul.addr %s135, 16
          %s137 = smul.addr %s136, 4
          %s138 = scalar_lea.vmem %s0, %s137
        $region28: #{basic_stem_forward.1} parent=23 // pred_fallthru
          _
      $region24: #{basic_stem_forward.1} parent=5 // pred_fallthru
        _
      %p139 = scmp.le.s32.totalorder 1, %s12
      %p140 = scmp.lt.s32.totalorder %s12, 3
      %p141 = pnand %p139, %p140
      %p142 = pneg %p141
      // Predicated region
      $region29: #{basic_stem_forward.1} parent=5 // pred_check
        _
      $region30: #{basic_stem_forward.1} parent=5 // pred_check_branch
        %144 = sbr.rel (%p141) target = $region32
      $region31: #{basic_stem_forward.1} parent=5 // pred_region
        %s145 = ssub.s32 %s12, 1
        %p146 = scmp.lt.s32.totalorder %s17, 1
        %s147 = scalar_select %p146, %s17, 1
        %s148 = smul.addr %s147, 16
        %s149 = smul.addr %s148, 4
        %s150 = scalar_lea.vmem %s0, %s149
        %p151 = pneg %p38
        %p152 = pneg %p35
        %p153 = pneg %p59
        %p154 = pneg %p56
        %p155 = pneg %p80
        %p156 = pneg %p77
        %p157 = pneg %p106
        %p158 = pneg %p103
        %s159 = sand.u32 %s93, 1
        %s160 = scalar_lea.sflag [#allocation4], %s159
        %s161 = sand.u32 %s93, 1
        %s162 = smul.addr %s161, 16
        %s163 = scalar_lea.vmem [#allocation3], %s162
        %p164 = scmp.lt.s32.totalorder %s17, 1
        %s165 = scalar_select %p164, %s17, 1
        %s166 = smul.addr %s165, 16
        %s167 = smul.addr %s166, 4
        %s168 = scalar_lea.vmem %s0, %s167
        %v170 = vld [vmem:[%s168] sm:$0xff]
        %v171 = vld [vmem:[%s168 + $0x8] sm:$0xff]
        %v172 = vld [vmem:[%s1] sm:$0xf]
        %v173 = vld [vmem:[%s1 + $0x4] sm:$0xf]
        %v174 = vld [vmem:[%s1 + $0x8] sm:$0xf]
        %v175 = vld [vmem:[%s1 + $0xc] sm:$0xf]
        %v176 = vld [vmem:[%s1 + $0x10] sm:$0xf]
        %v177 = vld [vmem:[%s1 + $0x14] sm:$0xf]
        %v178 = vld [vmem:[%s1 + $0x18] sm:$0xf]
        %v179 = vld [vmem:[%s1 + $0x1c] sm:$0xf]
        %v180 = vld [vmem:[%s1 + $0x20] sm:$0xf]
        %v181 = vld [vmem:[%s1 + $0x24] sm:$0xf]
        %v182 = vld [vmem:[%s1 + $0x28] sm:$0xf]
        %v183 = vld [vmem:[%s1 + $0x2c] sm:$0xf]
        %v184 = vld [vmem:[%s1 + $0x30] sm:$0xf]
        %v185 = vld [vmem:[%s1 + $0x34] sm:$0xf]
        %v186 = vld [vmem:[%s1 + $0x38] sm:$0xf]
        %v187 = vld [vmem:[%s1 + $0x3c] sm:$0xf]
        %v188 = vld [vmem:[%s1 + $0x40] sm:$0xf]
        %v189 = vld [vmem:[%s1 + $0x44] sm:$0xf]
        %v190 = vld [vmem:[%s1 + $0x48] sm:$0x3]
        %v191 = vld [vmem:[%s2] sm:$0x1]
        %v193 = vlaneseq
        %v194 = vshrl.u32 %v193, 7
        %v195 = vsub.s32 0, %v194
        %v196 = vrot.slane %v191, %v195
        %v200 = vunpack.c.l.b16 %v170
        %v201 = vunpack.c.h.b16 %v170
        %v202 = vunpack.c.l.b16 %v171
        %v203 = vunpack.c.h.b16 %v171
        %v204 = vpack.c.b16 %v202, %v200
        %v205 = vpack.c.b16 %v203, %v201
        %v226 = vunpack.c.l.b16 %v172
        %v227 = vunpack.c.l.b16 %v173
        %v228 = vunpack.c.l.b16 %v174
        %v229 = vunpack.c.l.b16 %v175
        %v230 = vunpack.c.l.b16 %v176
        %v231 = vunpack.c.l.b16 %v177
        %v232 = vunpack.c.l.b16 %v178
        %v233 = vunpack.c.l.b16 %v179
        %v234 = vunpack.c.l.b16 %v180
        %v235 = vunpack.c.l.b16 %v181
        %v236 = vunpack.c.l.b16 %v182
        %v237 = vunpack.c.l.b16 %v183
        %v238 = vunpack.c.l.b16 %v184
        %v239 = vunpack.c.l.b16 %v185
        %v240 = vunpack.c.l.b16 %v186
        %v241 = vunpack.c.l.b16 %v187
        %v242 = vunpack.c.l.b16 %v188
        %v243 = vunpack.c.l.b16 %v189
        %v244 = vunpack.c.l.b16 %v190
        %v245 = vpack.c.b16 %v227, %v226
        %v246 = vpack.c.b16 %v229, %v228
        %v247 = vpack.c.b16 %v231, %v230
        %v248 = vpack.c.b16 %v233, %v232
        %v249 = vpack.c.b16 %v235, %v234
        %v250 = vpack.c.b16 %v237, %v236
        %v251 = vpack.c.b16 %v239, %v238
        %v252 = vpack.c.b16 %v241, %v240
        %v253 = vpack.c.b16 %v243, %v242
        %v254 = vpack.c.b16 %v244, %v244
        %vm264 = vcmask 154624
        %v266 = vsel %vm264, %v205, 0
        %vm268 = vcmask 1040384
        %vm269 = vcmask 1041408
        %v270 = vsel %vm268, 4294967295, 65535
        %v271 = vsel %vm269, %v270, 0
        %v273 = vand.u32 %v254, %v271
        %275 = vmatprep.subr.bf16.mxu0 0
        %276 = vmatpush1.bf16.msra.mxu0 %v245
        %277 = vmatprep.subr.bf16.mxu0 0
        %278 = vmatpush1.bf16.msra.mxu0 %v246
        %279 = vmatprep.subr.bf16.mxu0 0
        %280 = vmatpush1.bf16.msra.mxu0 %v247
        %281 = vmatprep.subr.bf16.mxu0 0
        %282 = vmatpush1.bf16.msra.mxu0 %v248
        %283 = vmatprep.subr.bf16.mxu0 0
        %284 = vmatpush1.bf16.msra.mxu0 %v249
        %285 = vmatprep.subr.bf16.mxu0 0
        %286 = vmatpush1.bf16.msra.mxu0 %v250
        %287 = vmatprep.subr.bf16.mxu0 0
        %288 = vmatpush1.bf16.msra.mxu0 %v251
        %289 = vmatprep.subr.bf16.mxu0 0
        %290 = vmatpush1.bf16.msra.mxu0 %v252
        %291 = vmatprep.subr.bf16.mxu0 0
        %292 = vmatpush1.bf16.msra.mxu0 %v253
        %293 = vmatprep.subr.bf16.mxu0 0
        %294 = vmatpush1.bf16.msra.mxu0 %v273
        %295 = vmatprep.subr.bf16.mxu0 0
        %296 = vmatpush1.bf16.msra.mxu0 0
        %297 = vmatprep.subr.bf16.mxu0 0
        %298 = vmatpush1.bf16.msra.mxu0 0
        %299 = vmatprep.subr.bf16.mxu0 0
        %300 = vmatpush1.bf16.msra.mxu0 0
        %301 = vmatprep.subr.bf16.mxu0 0
        %302 = vmatpush1.bf16.msra.mxu0 0
        %303 = vmatprep.subr.bf16.mxu0 0
        %304 = vmatpush1.bf16.msra.mxu0 0
        %305 = vmatprep.subr.bf16.mxu0 0
        %306 = vmatpush1.bf16.msra.mxu0 0
        %307 = vmatprep.mubr.bf16.mxu0 %v266
        %308 = vmatmul.mubr.bf16.gmra.mrb[0].mxu0 %v204
        %v309 = vpop.f32.mrb[0].mxu0
        %v310 = vadd.f32 %v196, %v309
        %v311 = vpop.f32.mrb[0].mxu0
        %v312 = vpop.f32.mrb[0].mxu0
        %v313 = vadd.f32 %v196, %v312
        %v314 = vpop.f32.mrb[0].mxu0
        %315 = vdwg.mxu0
        %v316 = vmax.f32 %v310, 0.0
        %v317 = vmax.f32 %v313, 0.0
        %s318 = scalar_lea.vmem %s168, 16
        %v319 = vld [vmem:[%s318] sm:$0xff]
        %v320 = vld [vmem:[%s318 + $0x8] sm:$0xff]
        %v323 = vunpack.c.l.b16 %v319
        %v324 = vunpack.c.h.b16 %v319
        %v325 = vunpack.c.l.b16 %v320
        %v326 = vunpack.c.h.b16 %v320
        %v327 = vpack.c.b16 %v325, %v323
        %v328 = vpack.c.b16 %v326, %v324
        %v331 = vsel %vm264, %v328, 0
        %333 = vmatprep.subr.bf16.mxu0 0
        %334 = vmatpush1.bf16.msra.mxu0 %v245
        %335 = vmatprep.subr.bf16.mxu0 0
        %336 = vmatpush1.bf16.msra.mxu0 %v246
        %337 = vmatprep.subr.bf16.mxu0 0
        %338 = vmatpush1.bf16.msra.mxu0 %v247
        %339 = vmatprep.subr.bf16.mxu0 0
        %340 = vmatpush1.bf16.msra.mxu0 %v248
        %341 = vmatprep.subr.bf16.mxu0 0
        %342 = vmatpush1.bf16.msra.mxu0 %v249
        %343 = vmatprep.subr.bf16.mxu0 0
        %344 = vmatpush1.bf16.msra.mxu0 %v250
        %345 = vmatprep.subr.bf16.mxu0 0
        %346 = vmatpush1.bf16.msra.mxu0 %v251
        %347 = vmatprep.subr.bf16.mxu0 0
        %348 = vmatpush1.bf16.msra.mxu0 %v252
        %349 = vmatprep.subr.bf16.mxu0 0
        %350 = vmatpush1.bf16.msra.mxu0 %v253
        %351 = vmatprep.subr.bf16.mxu0 0
        %352 = vmatpush1.bf16.msra.mxu0 %v273
        %353 = vmatprep.subr.bf16.mxu0 0
        %354 = vmatpush1.bf16.msra.mxu0 0
        %355 = vmatprep.subr.bf16.mxu0 0
        %356 = vmatpush1.bf16.msra.mxu0 0
        %357 = vmatprep.subr.bf16.mxu0 0
        %358 = vmatpush1.bf16.msra.mxu0 0
        %359 = vmatprep.subr.bf16.mxu0 0
        %360 = vmatpush1.bf16.msra.mxu0 0
        %361 = vmatprep.subr.bf16.mxu0 0
        %362 = vmatpush1.bf16.msra.mxu0 0
        %363 = vmatprep.subr.bf16.mxu0 0
        %364 = vmatpush1.bf16.msra.mxu0 0
        %365 = vmatprep.mubr.bf16.mxu0 %v331
        %366 = vmatmul.mubr.bf16.gmra.mrb[0].mxu0 %v327
        %v367 = vpop.f32.mrb[0].mxu0
        %v368 = vadd.f32 %v196, %v367
        %v369 = vpop.f32.mrb[0].mxu0
        %v370 = vpop.f32.mrb[0].mxu0
        %v371 = vadd.f32 %v196, %v370
        %v372 = vpop.f32.mrb[0].mxu0
        %373 = vdwg.mxu0
        %v374 = vmax.f32 %v368, 0.0
        %v375 = vmax.f32 %v371, 0.0
        %s376 = scalar_lea.vmem %s168, 32
        %v377 = vld [vmem:[%s376] sm:$0xff]
        %v378 = vld [vmem:[%s376 + $0x8] sm:$0xff]
        %v381 = vunpack.c.l.b16 %v377
        %v382 = vunpack.c.h.b16 %v377
        %v383 = vunpack.c.l.b16 %v378
        %v384 = vunpack.c.h.b16 %v378
        %v385 = vpack.c.b16 %v383, %v381
        %v386 = vpack.c.b16 %v384, %v382
        %v389 = vsel %vm264, %v386, 0
        %391 = vmatprep.subr.bf16.mxu0 0
        %392 = vmatpush1.bf16.msra.mxu0 %v245
        %393 = vmatprep.subr.bf16.mxu0 0
        %394 = vmatpush1.bf16.msra.mxu0 %v246
        %395 = vmatprep.subr.bf16.mxu0 0
        %396 = vmatpush1.bf16.msra.mxu0 %v247
        %397 = vmatprep.subr.bf16.mxu0 0
        %398 = vmatpush1.bf16.msra.mxu0 %v248
        %399 = vmatprep.subr.bf16.mxu0 0
        %400 = vmatpush1.bf16.msra.mxu0 %v249
        %401 = vmatprep.subr.bf16.mxu0 0
        %402 = vmatpush1.bf16.msra.mxu0 %v250
        %403 = vmatprep.subr.bf16.mxu0 0
        %404 = vmatpush1.bf16.msra.mxu0 %v251
        %405 = vmatprep.subr.bf16.mxu0 0
        %406 = vmatpush1.bf16.msra.mxu0 %v252
        %407 = vmatprep.subr.bf16.mxu0 0
        %408 = vmatpush1.bf16.msra.mxu0 %v253
        %409 = vmatprep.subr.bf16.mxu0 0
        %410 = vmatpush1.bf16.msra.mxu0 %v273
        %411 = vmatprep.subr.bf16.mxu0 0
        %412 = vmatpush1.bf16.msra.mxu0 0
        %413 = vmatprep.subr.bf16.mxu0 0
        %414 = vmatpush1.bf16.msra.mxu0 0
        %415 = vmatprep.subr.bf16.mxu0 0
        %416 = vmatpush1.bf16.msra.mxu0 0
        %417 = vmatprep.subr.bf16.mxu0 0
        %418 = vmatpush1.bf16.msra.mxu0 0
        %419 = vmatprep.subr.bf16.mxu0 0
        %420 = vmatpush1.bf16.msra.mxu0 0
        %421 = vmatprep.subr.bf16.mxu0 0
        %422 = vmatpush1.bf16.msra.mxu0 0
        %423 = vmatprep.mubr.bf16.mxu0 %v389
        %424 = vmatmul.mubr.bf16.gmra.mrb[0].mxu0 %v385
        %v425 = vpop.f32.mrb[0].mxu0
        %v426 = vadd.f32 %v196, %v425
        %v427 = vpop.f32.mrb[0].mxu0
        %v428 = vpop.f32.mrb[0].mxu0
        %v429 = vadd.f32 %v196, %v428
        %v430 = vpop.f32.mrb[0].mxu0
        %431 = vdwg.mxu0
        %v432 = vmax.f32 %v426, 0.0
        %v433 = vmax.f32 %v429, 0.0
        %s434 = scalar_lea.vmem %s168, 48
        %v435 = vld [vmem:[%s434] sm:$0xff]
        %v436 = vld [vmem:[%s434 + $0x8] sm:$0xff]
        %v439 = vunpack.c.l.b16 %v435
        %v440 = vunpack.c.h.b16 %v435
        %v441 = vunpack.c.l.b16 %v436
        %v442 = vunpack.c.h.b16 %v436
        %v443 = vpack.c.b16 %v441, %v439
        %v444 = vpack.c.b16 %v442, %v440
        %v447 = vsel %vm264, %v444, 0
        %449 = vmatprep.subr.bf16.mxu0 0
        %450 = vmatpush1.bf16.msra.mxu0 %v245
        %451 = vmatprep.subr.bf16.mxu0 0
        %452 = vmatpush1.bf16.msra.mxu0 %v246
        %453 = vmatprep.subr.bf16.mxu0 0
        %454 = vmatpush1.bf16.msra.mxu0 %v247
        %455 = vmatprep.subr.bf16.mxu0 0
        %456 = vmatpush1.bf16.msra.mxu0 %v248
        %457 = vmatprep.subr.bf16.mxu0 0
        %458 = vmatpush1.bf16.msra.mxu0 %v249
        %459 = vmatprep.subr.bf16.mxu0 0
        %460 = vmatpush1.bf16.msra.mxu0 %v250
        %461 = vmatprep.subr.bf16.mxu0 0
        %462 = vmatpush1.bf16.msra.mxu0 %v251
        %463 = vmatprep.subr.bf16.mxu0 0
        %464 = vmatpush1.bf16.msra.mxu0 %v252
        %465 = vmatprep.subr.bf16.mxu0 0
        %466 = vmatpush1.bf16.msra.mxu0 %v253
        %467 = vmatprep.subr.bf16.mxu0 0
        %468 = vmatpush1.bf16.msra.mxu0 %v273
        %469 = vmatprep.subr.bf16.mxu0 0
        %470 = vmatpush1.bf16.msra.mxu0 0
        %471 = vmatprep.subr.bf16.mxu0 0
        %472 = vmatpush1.bf16.msra.mxu0 0
        %473 = vmatprep.subr.bf16.mxu0 0
        %474 = vmatpush1.bf16.msra.mxu0 0
        %475 = vmatprep.subr.bf16.mxu0 0
        %476 = vmatpush1.bf16.msra.mxu0 0
        %477 = vmatprep.subr.bf16.mxu0 0
        %478 = vmatpush1.bf16.msra.mxu0 0
        %479 = vmatprep.subr.bf16.mxu0 0
        %480 = vmatpush1.bf16.msra.mxu0 0
        %481 = vmatprep.mubr.bf16.mxu0 %v447
        %482 = vmatmul.mubr.bf16.gmra.mrb[0].mxu0 %v443
        %v483 = vpop.f32.mrb[0].mxu0
        %v484 = vadd.f32 %v196, %v483
        %v485 = vpop.f32.mrb[0].mxu0
        %v486 = vpop.f32.mrb[0].mxu0
        %v487 = vadd.f32 %v196, %v486
        %v488 = vpop.f32.mrb[0].mxu0
        %489 = vdwg.mxu0
        %v490 = vmax.f32 %v484, 0.0
        %v491 = vmax.f32 %v487, 0.0
        %v492 = vlaneseq
        %v493 = vshrl.u32 %v492, 7
        %v494 = vadd.s32 %v493, 8
        %vm495 = vcmp.lt.s32.totalorder %v493, 0
        %v496 = vsub.s32 0, %v493
        %v497 = vsel %vm495, %v496, %v493
        %v498 = vshrl.u32 %v497, 2
        %v499 = vand.u32 %v497, 3
        %v500 = vsub.s32 0, %v499
        %v501 = vsel %vm495, %v500, %v499
        %vm502 = vcmp.lt.s32.totalorder %v494, 0
        %v503 = vsub.s32 0, %v494
        %v504 = vsel %vm502, %v503, %v494
        %v505 = vshrl.u32 %v504, 2
        %v506 = vand.u32 %v504, 3
        %v507 = vsub.s32 0, %v506
        %v508 = vsel %vm502, %v507, %v506
        %vm509 = vcmp.ne.s32.totalorder %v501, 0
        %vm510 = vcmp.ne.s32.totalorder %v508, 0
        %vm511 = vcmp.lt.s32.totalorder %v501, 0
        %vm512 = vcmp.lt.s32.totalorder %v508, 0
        %vm513 = vmand %vm511, %vm509
        %vm514 = vmand %vm512, %vm510
        %v515 = vadd.s32 %v501, 4
        %v516 = vadd.s32 %v508, 4
        %v517 = vsel %vm513, %v515, %v501
        %v518 = vsel %vm514, %v516, %v508
        %vm519 = vcmp.eq.s32.totalorder %v517, 0
        %vm520 = vcmp.eq.s32.totalorder %v518, 0
        %vm521 = vcmask 520192
        %522 = vst.msk [vmem:[#allocation2] sm:$0x1f] %vm521, 0.0
        %v523 = vmax.f32 %v316, %v374
        %v524 = vmax.f32 %v317, %v375
        %v525 = vmax.f32 %v432, %v490
        %v526 = vmax.f32 %v433, %v491
        %v527 = vmax.f32 %v523, %v525
        %v528 = vmax.f32 %v524, %v526
        %vm529 = vcmask 523264
        %530 = vst.msk [vmem:[#allocation2 + $0x5] sm:$0xff] %vm529, %v374
        %531 = vst.msk [vmem:[#allocation2 + $0xd] sm:$0xff] %vm529, %v375
        %v532 = vld [vmem:[#allocation2 + $0x4] sm:$0xff]
        %v533 = vld [vmem:[#allocation2 + $0xc] sm:$0xff]
        %v534 = vsel %vm519, 1, 0
        %v535 = vsel %vm520, 1, 0
        %vm536 = vcmp.eq.s32.totalorder %v534, 1
        %vm537 = vcmp.eq.s32.totalorder %v535, 1
        %v538 = vsel %vm536, 0.0, %v532
        %v539 = vsel %vm537, 0.0, %v533
        %v540 = vmax.f32 %v527, %v538
        %v541 = vmax.f32 %v528, %v539
        %542 = vst.msk [vmem:[#allocation2 + $0x5] sm:$0xff] %vm529, %v432
        %543 = vst.msk [vmem:[#allocation2 + $0xd] sm:$0xff] %vm529, %v433
        %v544 = vld [vmem:[#allocation2 + $0x1] sm:$0xff]
        %v545 = vld [vmem:[#allocation2 + $0x9] sm:$0xff]
        %v546 = vmax.f32 %v540, %v544
        %v547 = vmax.f32 %v541, %v545
        %548 = vst.msk [vmem:[#allocation2 + $0x5] sm:$0xff] %vm529, %v490
        %549 = vst.msk [vmem:[#allocation2 + $0xd] sm:$0xff] %vm529, %v491
        %v550 = vld [vmem:[#allocation2 + $0x1] sm:$0xff]
        %v551 = vld [vmem:[#allocation2 + $0x9] sm:$0xff]
        %v552 = vmax.f32 %v546, %v550
        %v553 = vmax.f32 %v547, %v551
        %v554 = vld [vmem:[#allocation2 + $0x4] sm:$0xff]
        %v555 = vld [vmem:[#allocation2 + $0xc] sm:$0xff]
        %v556 = vsel %vm536, 0.0, %v554
        %v557 = vsel %vm537, 0.0, %v555
        %v558 = vmax.f32 %v552, %v556
        %v559 = vmax.f32 %v553, %v557
        %v560 = vld [vmem:[#allocation2] sm:$0xff]
        %v561 = vld [vmem:[#allocation2 + $0x8] sm:$0xff]
        %v562 = vsel %vm536, 0.0, %v560
        %v563 = vsel %vm537, 0.0, %v561
        %v564 = vmax.f32 %v558, %v562
        %v565 = vmax.f32 %v559, %v563
        %566 = vst.msk [vmem:[%s163] sm:$0xff] %vm529, %v564
        %567 = vst.msk [vmem:[%s163 + $0x8] sm:$0xff] %vm529, %v565
        %s568 = sand.u32 %s93, 1
        %s569 = scalar_lea.sflag [#allocation4], %s568
        %s570 = sand.u32 %s93, 1
        %s571 = smul.addr %s570, 16
        %s572 = scalar_lea.vmem [#allocation3], %s571
        // Predicated region
        $region33: #{basic_stem_forward.1} parent=31 // pred_check
          %p573 = pneg %p103
        $region34: #{basic_stem_forward.1} parent=31 // pred_check_branch
          %575 = sbr.rel (%p573) target = $region36
        $region35: #{basic_stem_forward.1} parent=31 // pred_region
          %s577 = ssub.s32 256, 256
          %578 = vsyncadd %s569, %s577
          %s579 = smul.addr %s17, 2
          %s580 = smul.addr %s579, 128
          %s581 = scalar_lea.hbm %s3, %s580
          %s582 = sshll.u32 %s572, 4
          %s583 = int_to_ptr.vmem [resolvable:$true] %s582
          %588 = dma.vmem_to_hbm [thread:$0]  %s583, 256, %s581, %s569, 128, 128, 8
        $region36: #{basic_stem_forward.1} parent=31 // pred_fallthru
          _
      $region32: #{basic_stem_forward.1} parent=5 // pred_fallthru
        _
      %p589 = scmp.le.s32.totalorder 2, %s12
      // Predicated region
      $region37: #{basic_stem_forward.1} parent=5 // pred_check
        %p590 = pneg %p589
      $region38: #{basic_stem_forward.1} parent=5 // pred_check_branch
        %592 = sbr.rel (%p590) target = $region40
      $region39: #{basic_stem_forward.1} parent=5 // pred_region
        %s593 = ssub.s32 %s12, 2
        // Predicated region
        $region41: #{basic_stem_forward.1} parent=39 // pred_check
          %p594 = pneg %p109
        $region42: #{basic_stem_forward.1} parent=39 // pred_check_branch
          %596 = sbr.rel (%p594) target = $region44
        $region43: #{basic_stem_forward.1} parent=39 // pred_region
          %s597 = sand.u32 %s94, 1
          %s598 = scalar_lea.sflag [#allocation4], %s597
          %s599 = sand.u32 %s94, 1
          %s600 = smul.addr %s599, 16
          %s601 = scalar_lea.vmem [#allocation3], %s600
          %602 = dma.done %s598, 256
        $region44: #{basic_stem_forward.1} parent=39 // pred_fallthru
          _
      $region40: #{basic_stem_forward.1} parent=5 // pred_fallthru
        _
    $region6: #{basic_stem_forward.1} parent=1 // loop_footer
      %s16 = sadd.s32 1, %s12
    $region7: #{basic_stem_forward.1} parent=1 // loop_footer_branch
      %11 = sbr.rel target = $region3
    $region8: #{basic_stem_forward.1} parent=1 // loop_exit
      _
    %603 = vsyncpa [#allocation4], 1
    %s604 = scalar_lea.sflag [#allocation4], 1
    %605 = vsyncpa %s604, 1

</llo_original>
